<compile_context>
chip_gen: v6e
topology: v6e:2x2x1
jax: 0.10.0
libtpu: 0.0.40
codegen_flags: <defaults>
</compile_context>

<pallas_src>
import functools

import jax
import jax.numpy as jnp
from jax.experimental import pallas as pl
from jax.experimental.pallas import tpu as pltpu


def _fused_mlp_kernel(*refs, n_layers):
    # refs = (xT_ref, w0, b0, w1, b1, ..., w_{L-1}, b_{L-1}, oT_ref)
    xT_ref = refs[0]
    wb_refs = refs[1:1 + 2 * n_layers]
    oT_ref = refs[1 + 2 * n_layers]

    h = xT_ref[...].astype(jnp.float32)                 # (d_in, tb): batch on lanes
    for l in range(n_layers):                           # statically unrolled
        w = wb_refs[2 * l][...]                         # (d_out_l, d_in_l), f32 or bf16
        b = wb_refs[2 * l + 1][...].astype(jnp.float32)  # (d_out_l, 1)
        # MXU matmul, always accumulate in f32; h cast is a no-op in the f32 path.
        y = jnp.dot(w, h.astype(w.dtype), preferred_element_type=jnp.float32)  # (d_out_l, tb)
        h = y + b                                       # lane-dense f32 bias add (VPU)
        if l < n_layers - 1:
            # TODO(synk): on v6e/v7x a packed-bf16 tanh roughly doubles EUP throughput;
            # kept f32 here because v5e has no bf16 EUP path and for the 1e-5 check.
            h = jnp.tanh(h)                             # lane-dense f32 tanh (EUP)
    oT_ref[...] = h.astype(oT_ref.dtype)                # lane-dense store


def fused_mlp(x, params, *, tb=None, compute_dtype=jnp.float32):
    """Fused y = MLP(x). Activations stay in VMEM; only batch is tiled (lane axis)."""
    B, d_in = x.shape
    n_layers = len(params)
    d_out = params[-1][0].shape[0]
    dims = [d_in] + [w.shape[0] for (w, _) in params]

    # --- batch-tile heuristic -------------------------------------------------------
    if tb is None:
        if B <= 1024 or B % 128 != 0:
            tb = B                                  # single grid step for small batches
        else:
            tb = B
            for cand in (1024, 512, 256, 128):      # many steps -> real pipelining
                if B % cand == 0 and B // cand >= 2:
                    tb = cand
                    break
    assert B % tb == 0, f"batch {B} must be divisible by tile {tb}"
    assert tb == B or tb % 128 == 0, "partial batch tile must be a multiple of 128 lanes"
    grid = (B // tb,)

    # --- inputs & specs (batch on the last/lane axis everywhere) ---------------------
    xT = x.T                                        # (d_in, B): layout plumbing in XLA

    cast_weights = jnp.dtype(compute_dtype) != jnp.dtype(jnp.float32)
    in_specs = [pl.BlockSpec((d_in, tb), lambda i: (0, i))]
    flat_inputs = [xT]
    wb_bytes = 0
    for (w, b) in params:
        w_in = w.astype(compute_dtype) if cast_weights else w   # pre-cast in HBM, not in-kernel
        # Constant index_map -> weights/biases resident; single-buffer them (saves 2x VMEM).
        in_specs.append(pl.BlockSpec(w_in.shape, lambda i: (0, 0),
                                     pipeline_mode=pl.Buffered(1)))
        in_specs.append(pl.BlockSpec(b.shape, lambda i: (0, 0),
                                     pipeline_mode=pl.Buffered(1)))
        flat_inputs.append(w_in)
        flat_inputs.append(b)
        wb_bytes += w_in.size * w_in.dtype.itemsize + b.size * b.dtype.itemsize
    # TODO(synk): if Sum(w+b) ever exceeds the VMEM budget (esp. v7x 64 MiB), switch to a
    # K/N-tiled grid (reduction axis last, "arbitrary", f32 VMEM accumulator with pl.when
    # init/finalize) instead of keeping full weights resident.

    # --- VMEM budget (weights single-buffered + double-buffered x/out tiles + live acts) ---
    act_bytes = 4 * tb * (2 * d_in + 2 * d_out + 2 * max(dims))
    vmem_needed = wb_bytes + act_bytes
    vmem_limit = int(min(64 * 1024 * 1024, max(32 * 1024 * 1024, 2 * vmem_needed)))

    # --- cost estimate: this kernel is EUP/VPU-dominated, not matmul-flop-dominated ---
    flops = 2 * B * sum(dims[i] * dims[i + 1] for i in range(n_layers))
    transcendentals = B * sum(dims[1:-1])
    bytes_accessed = (x.size * x.dtype.itemsize + wb_bytes
                      + B * d_out * x.dtype.itemsize)

    kernel = functools.partial(_fused_mlp_kernel, n_layers=n_layers)

    outT = pl.pallas_call(
        kernel,
        out_shape=jax.ShapeDtypeStruct((d_out, B), x.dtype),
        grid_spec=pl.GridSpec(
            grid=grid,
            in_specs=in_specs,
            out_specs=pl.BlockSpec((d_out, tb), lambda i: (0, i)),
        ),
        compiler_params=pltpu.CompilerParams(
            dimension_semantics=("parallel",),
            vmem_limit_bytes=vmem_limit),
        cost_estimate=pl.CostEstimate(flops=flops,
                                      transcendentals=transcendentals,
                                      bytes_accessed=bytes_accessed),
    )(*flat_inputs)

    return outT.T                                    # back to (B, d_out)


class LinearMLPPallas:
    """Pallas equivalent of the PyTorch LinearMLP(dims, nonlin=nn.Tanh)."""

    def __init__(self, dims, key):
        self.dims = dims
        self.params = []
        for i in range(len(dims) - 1):
            key, kw, kb = jax.random.split(key, 3)
            fan_in = dims[i]
            # matches nn.Linear's U(-1/sqrt(fan_in), 1/sqrt(fan_in)) init scheme
            bound = 1.0 / jnp.sqrt(fan_in)
            w = jax.random.uniform(kw, (dims[i + 1], dims[i]),    # (out, in) like nn.Linear
                                   jnp.float32, -bound, bound)
            b = jax.random.uniform(kb, (dims[i + 1], 1),
                                   jnp.float32, -bound, bound)
            self.params.append((w, b))

    def __call__(self, x, *, tb=None, compute_dtype=jnp.float32):
        return fused_mlp(x, self.params, tb=tb, compute_dtype=compute_dtype)


def reference_forward(x, params):
    n_layers = len(params)
    for i, (w, b) in enumerate(params):
        x = x @ w.T + b.T                           # w: (out, in), b: (out, 1)
        if i < n_layers - 1:
            x = jnp.tanh(x)
    return x


if __name__ == "__main__":
    key = jax.random.PRNGKey(0)
    k_model, k_x = jax.random.split(key)

    dims = [16, 32, 32, 8]   # LinearMLP(dims=[16,32,32,8], nonlin=nn.Tanh)
    batch = 16

    model = LinearMLPPallas(dims, k_model)
    x = jax.random.normal(k_x, (batch, dims[0]), jnp.float32)

    out = model(x)                       # single fused pallas_call, grid=(1,)
    out = jax.block_until_ready(out)

    ref = reference_forward(x, model.params)
    assert out.shape == (batch, dims[-1])
    assert jnp.allclose(out, ref, atol=1e-5, rtol=1e-5)

    print("KERNEL_OK")
</pallas_src>

<mosaic_0001>
module attributes {stable_mosaic.version = 11 : i64} {
  func.func @_fused_mlp_kernel(%arg0: i32, %arg1: memref<16x16xf32, #tpu.memory_space<vmem>>, %arg2: memref<32x16xf32, #tpu.memory_space<vmem>>, %arg3: memref<32x1xf32, #tpu.memory_space<vmem>>, %arg4: memref<32x32xf32, #tpu.memory_space<vmem>>, %arg5: memref<32x1xf32, #tpu.memory_space<vmem>>, %arg6: memref<8x32xf32, #tpu.memory_space<vmem>>, %arg7: memref<8x1xf32, #tpu.memory_space<vmem>>, %arg8: memref<8x16xf32, #tpu.memory_space<vmem>>) attributes {dimension_semantics = [#tpu.dimension_semantics<parallel>], iteration_bounds = array<i64: 1>, scalar_prefetch = 0 : i64, scratch_operands = 0 : i64, tpu.core_type = #tpu.core_type<tc>, window_params = [{transform_indices = @transform_0, window_bounds = array<i64: 16, 16>}, {pipeline_mode = #tpu.pipeline_mode<synchronous>, transform_indices = @transform_1, window_bounds = array<i64: 32, 16>}, {pipeline_mode = #tpu.pipeline_mode<synchronous>, transform_indices = @transform_2, window_bounds = array<i64: 32, 1>}, {pipeline_mode = #tpu.pipeline_mode<synchronous>, transform_indices = @transform_3, window_bounds = array<i64: 32, 32>}, {pipeline_mode = #tpu.pipeline_mode<synchronous>, transform_indices = @transform_4, window_bounds = array<i64: 32, 1>}, {pipeline_mode = #tpu.pipeline_mode<synchronous>, transform_indices = @transform_5, window_bounds = array<i64: 8, 32>}, {pipeline_mode = #tpu.pipeline_mode<synchronous>, transform_indices = @transform_6, window_bounds = array<i64: 8, 1>}, {transform_indices = @transform_7, window_bounds = array<i64: 8, 16>}]} {
    %c0 = arith.constant 0 : index
    %c0_0 = arith.constant 0 : index
    %0 = vector.load %arg1[%c0, %c0_0] : memref<16x16xf32, #tpu.memory_space<vmem>>, vector<16x16xf32>
    %c0_1 = arith.constant 0 : index
    %c0_2 = arith.constant 0 : index
    %1 = vector.load %arg2[%c0_1, %c0_2] : memref<32x16xf32, #tpu.memory_space<vmem>>, vector<32x16xf32>
    %c0_3 = arith.constant 0 : index
    %c0_4 = arith.constant 0 : index
    %2 = vector.load %arg3[%c0_3, %c0_4] : memref<32x1xf32, #tpu.memory_space<vmem>>, vector<32x1xf32>
    %cst = arith.constant dense<0.000000e+00> : vector<32x16xf32>
    %3 = tpu.matmul %1, %0, %cst {dimension_numbers = #tpu.dot_dimension_numbers<[1], [0], [0], [1], [0, 0, 1, 1], [], []>} : vector<32x16xf32>, vector<16x16xf32>, vector<32x16xf32> -> vector<32x16xf32>
    %4 = vector.broadcast %2 : vector<32x1xf32> to vector<32x16xf32>
    %5 = arith.addf %3, %4 : vector<32x16xf32>
    %6 = math.tanh %5 : vector<32x16xf32>
    %c0_5 = arith.constant 0 : index
    %c0_6 = arith.constant 0 : index
    %7 = vector.load %arg4[%c0_5, %c0_6] : memref<32x32xf32, #tpu.memory_space<vmem>>, vector<32x32xf32>
    %c0_7 = arith.constant 0 : index
    %c0_8 = arith.constant 0 : index
    %8 = vector.load %arg5[%c0_7, %c0_8] : memref<32x1xf32, #tpu.memory_space<vmem>>, vector<32x1xf32>
    %cst_9 = arith.constant dense<0.000000e+00> : vector<32x16xf32>
    %9 = tpu.matmul %7, %6, %cst_9 {dimension_numbers = #tpu.dot_dimension_numbers<[1], [0], [0], [1], [0, 0, 1, 1], [], []>} : vector<32x32xf32>, vector<32x16xf32>, vector<32x16xf32> -> vector<32x16xf32>
    %10 = vector.broadcast %8 : vector<32x1xf32> to vector<32x16xf32>
    %11 = arith.addf %9, %10 : vector<32x16xf32>
    %12 = math.tanh %11 : vector<32x16xf32>
    %c0_10 = arith.constant 0 : index
    %c0_11 = arith.constant 0 : index
    %13 = vector.load %arg6[%c0_10, %c0_11] : memref<8x32xf32, #tpu.memory_space<vmem>>, vector<8x32xf32>
    %c0_12 = arith.constant 0 : index
    %c0_13 = arith.constant 0 : index
    %14 = vector.load %arg7[%c0_12, %c0_13] : memref<8x1xf32, #tpu.memory_space<vmem>>, vector<8x1xf32>
    %cst_14 = arith.constant dense<0.000000e+00> : vector<8x16xf32>
    %15 = tpu.matmul %13, %12, %cst_14 {dimension_numbers = #tpu.dot_dimension_numbers<[1], [0], [0], [1], [0, 0, 1, 1], [], []>} : vector<8x32xf32>, vector<32x16xf32>, vector<8x16xf32> -> vector<8x16xf32>
    %16 = vector.broadcast %14 : vector<8x1xf32> to vector<8x16xf32>
    %17 = arith.addf %15, %16 : vector<8x16xf32>
    %c0_15 = arith.constant 0 : index
    %c0_16 = arith.constant 0 : index
    %18 = vector.load %arg8[%c0_15, %c0_16] : memref<8x16xf32, #tpu.memory_space<vmem>>, vector<8x16xf32>
    tpu.vector_store %arg8[%c0_15, %c0_16], %17 {strides = array<i32>} : memref<8x16xf32, #tpu.memory_space<vmem>>, vector<8x16xf32>,
    return
  }
  func.func @transform_0(%arg0: i32) -> (i32, i32) {
    %c0_i32 = arith.constant 0 : i32
    %c0_i32_0 = arith.constant 0 : i32
    return %c0_i32, %arg0 : i32, i32
  }
  func.func @transform_1(%arg0: i32) -> (i32, i32) {
    %c0_i32 = arith.constant 0 : i32
    %c0_i32_0 = arith.constant 0 : i32
    %c0_i32_1 = arith.constant 0 : i32
    return %c0_i32, %c0_i32_0 : i32, i32
  }
  func.func @transform_2(%arg0: i32) -> (i32, i32) {
    %c0_i32 = arith.constant 0 : i32
    %c0_i32_0 = arith.constant 0 : i32
    %c0_i32_1 = arith.constant 0 : i32
    return %c0_i32, %c0_i32_0 : i32, i32
  }
  func.func @transform_3(%arg0: i32) -> (i32, i32) {
    %c0_i32 = arith.constant 0 : i32
    %c0_i32_0 = arith.constant 0 : i32
    %c0_i32_1 = arith.constant 0 : i32
    return %c0_i32, %c0_i32_0 : i32, i32
  }
  func.func @transform_4(%arg0: i32) -> (i32, i32) {
    %c0_i32 = arith.constant 0 : i32
    %c0_i32_0 = arith.constant 0 : i32
    %c0_i32_1 = arith.constant 0 : i32
    return %c0_i32, %c0_i32_0 : i32, i32
  }
  func.func @transform_5(%arg0: i32) -> (i32, i32) {
    %c0_i32 = arith.constant 0 : i32
    %c0_i32_0 = arith.constant 0 : i32
    %c0_i32_1 = arith.constant 0 : i32
    return %c0_i32, %c0_i32_0 : i32, i32
  }
  func.func @transform_6(%arg0: i32) -> (i32, i32) {
    %c0_i32 = arith.constant 0 : i32
    %c0_i32_0 = arith.constant 0 : i32
    %c0_i32_1 = arith.constant 0 : i32
    return %c0_i32, %c0_i32_0 : i32, i32
  }
  func.func @transform_7(%arg0: i32) -> (i32, i32) {
    %c0_i32 = arith.constant 0 : i32
    %c0_i32_0 = arith.constant 0 : i32
    return %c0_i32, %arg0 : i32, i32
  }
}

</mosaic_0001>

<llo_original>
// kernel: tpu_custom_call.1
$region0: #{tpu_custom_call.1}
  #allocation0 [shape = 'u32[]', space=smem, size = 0x4, offset = 0x4, fixed_abs, tag = 'smem constant byte address 0x4 - core index']
  #allocation1 [shape = 'u32[144,128]{1,0:T(1,128)}', space=vmem, size = 0x12000, scoped, tag = 'internal scratch']
  %s0 = inlined_call_operand.vmem [shape: f32[16,16], index: 0, kind: input, shape index: {}]
  %s1 = inlined_call_operand.vmem [shape: f32[32,16], index: 1, kind: input, shape index: {}]
  %s2 = inlined_call_operand.vmem [shape: f32[32,1], index: 2, kind: input, shape index: {}]
  %s3 = inlined_call_operand.vmem [shape: f32[32,32], index: 3, kind: input, shape index: {}]
  %s4 = inlined_call_operand.vmem [shape: f32[32,1], index: 4, kind: input, shape index: {}]
  %s5 = inlined_call_operand.vmem [shape: f32[8,32], index: 5, kind: input, shape index: {}]
  %s6 = inlined_call_operand.vmem [shape: f32[8,1], index: 6, kind: input, shape index: {}]
  %s7 = inlined_call_operand.hbm [shape: f32[8,16], index: 7, kind: output, shape index: {}]
  %s8 = sld [smem:[#allocation0]]
  $region38: #{tpu_custom_call.1} parent=0
    _
  %s10 = ssub.s32 1, %s8
  %s11 = scalar_select 0, %s10, %s8
  $region1: #{tpu_custom_call.1} parent=0
    #allocation2 [shape = 'u8[4096]{0}', space=vmem, size = 0x1000, scoped, tag = 'output window, operand 0, single buffered']
    #allocation3 [shape = 's32[1]{0}', space=sflag, size = 0x4, scoped, tag = 'scoped memory for tpu_custom_call.1']
    %12 = vsyncpa [#allocation3], 0
    // Predicated region
    $region2: #{tpu_custom_call.1} parent=1 // pred_check
      _
    $region3: #{tpu_custom_call.1} parent=1 // pred_check_branch
      %14 = sbr.rel (0) target = $region5
    $region4: #{tpu_custom_call.1} parent=1 // pred_region
      _
    $region5: #{tpu_custom_call.1} parent=1 // pred_fallthru
      _
    // Predicated region
    $region6: #{tpu_custom_call.1} parent=1 // pred_check
      _
    $region7: #{tpu_custom_call.1} parent=1 // pred_check_branch
      %16 = sbr.rel (0) target = $region9
    $region8: #{tpu_custom_call.1} parent=1 // pred_region
      _
    $region9: #{tpu_custom_call.1} parent=1 // pred_fallthru
      _
    // Predicated region
    $region10: #{tpu_custom_call.1} parent=1 // pred_check
      _
    $region11: #{tpu_custom_call.1} parent=1 // pred_check_branch
      %18 = sbr.rel (0) target = $region13
    $region12: #{tpu_custom_call.1} parent=1 // pred_region
      _
    $region13: #{tpu_custom_call.1} parent=1 // pred_fallthru
      _
    // Predicated region
    $region14: #{tpu_custom_call.1} parent=1 // pred_check
      _
    $region15: #{tpu_custom_call.1} parent=1 // pred_check_branch
      %20 = sbr.rel (0) target = $region17
    $region16: #{tpu_custom_call.1} parent=1 // pred_region
      _
    $region17: #{tpu_custom_call.1} parent=1 // pred_fallthru
      _
    // Predicated region
    $region18: #{tpu_custom_call.1} parent=1 // pred_check
      _
    $region19: #{tpu_custom_call.1} parent=1 // pred_check_branch
      %22 = sbr.rel (0) target = $region21
    $region20: #{tpu_custom_call.1} parent=1 // pred_region
      _
    $region21: #{tpu_custom_call.1} parent=1 // pred_fallthru
      _
    // Predicated region
    $region22: #{tpu_custom_call.1} parent=1 // pred_check
      _
    $region23: #{tpu_custom_call.1} parent=1 // pred_check_branch
      %24 = sbr.rel (0) target = $region25
    $region24: #{tpu_custom_call.1} parent=1 // pred_region
      _
    $region25: #{tpu_custom_call.1} parent=1 // pred_fallthru
      _
    // Predicated region
    $region26: #{tpu_custom_call.1} parent=1 // pred_check
      _
    $region27: #{tpu_custom_call.1} parent=1 // pred_check_branch
      %26 = sbr.rel (0) target = $region29
    $region28: #{tpu_custom_call.1} parent=1 // pred_region
      _
    $region29: #{tpu_custom_call.1} parent=1 // pred_fallthru
      _
    %v27 = vld [vmem:[%s0] sm:$0xff]
    %v28 = vld [vmem:[%s0 + $0x8] sm:$0xff]
    %v29 = vld [vmem:[%s1] sm:$0xff]
    %v30 = vld [vmem:[%s1 + $0x8] sm:$0xff]
    %v31 = vld [vmem:[%s1 + $0x10] sm:$0xff]
    %v32 = vld [vmem:[%s1 + $0x18] sm:$0xff]
    %v33 = vld [vmem:[%s2] sm:$0xff]
    %v34 = vld [vmem:[%s2 + $0x8] sm:$0xff]
    %v35 = vld [vmem:[%s2 + $0x10] sm:$0xff]
    %v36 = vld [vmem:[%s2 + $0x18] sm:$0xff]
    %38 = vset.pattern.permute.xlu0 0
    %39 = vperm.xlu0 %38, %v33
    %v40 = vpop.permute.xlu0 %39
    %43 = vset.pattern.permute.xlu0 0
    %44 = vperm.xlu0 %43, %v34
    %v45 = vpop.permute.xlu0 %44
    %48 = vset.pattern.permute.xlu0 0
    %49 = vperm.xlu0 %48, %v35
    %v50 = vpop.permute.xlu0 %49
    %53 = vset.pattern.permute.xlu0 0
    %54 = vperm.xlu0 %53, %v36
    %v55 = vpop.permute.xlu0 %54
    %vm57 = vcmask 130048
    %v59 = vsel %vm57, %v29, 0
    %v62 = vsel %vm57, %v30, 0
    %v65 = vsel %vm57, %v31, 0
    %v68 = vsel %vm57, %v32, 0
    %70 = vmatprep.subr.mxu0 0.0
    %71 = vmatpush1.msra.mxu0 0.0
    %72 = vmatprep.subr.mxu0 0.0
    %73 = vmatpush1.msra.mxu0 0.0
    %74 = vmatprep.subr.mxu0 0.0
    %75 = vmatpush1.msra.mxu0 0.0
    %76 = vmatprep.subr.mxu0 0.0
    %77 = vmatpush1.msra.mxu0 0.0
    %78 = vmatprep.subr.mxu0 0.0
    %79 = vmatpush1.msra.mxu0 0.0
    %80 = vmatprep.subr.mxu0 0.0
    %81 = vmatpush1.msra.mxu0 0.0
    %82 = vmatprep.subr.mxu0 0.0
    %83 = vmatpush1.msra.mxu0 0.0
    %84 = vmatprep.subr.mxu0 0.0
    %85 = vmatpush1.msra.mxu0 0.0
    %86 = vmatprep.subr.mxu0 0.0
    %87 = vmatpush1.msra.mxu0 0.0
    %88 = vmatprep.subr.mxu0 0.0
    %89 = vmatpush1.msra.mxu0 0.0
    %90 = vmatprep.subr.mxu0 0.0
    %91 = vmatpush1.msra.mxu0 0.0
    %92 = vmatprep.subr.mxu0 0.0
    %93 = vmatpush1.msra.mxu0 0.0
    %94 = vmatprep.subr.mxu0 0.0
    %95 = vmatpush1.msra.mxu0 0.0
    %96 = vmatprep.subr.mxu0 0.0
    %97 = vmatpush1.msra.mxu0 0.0
    %98 = vmatprep.subr.mxu0 0.0
    %99 = vmatpush1.msra.mxu0 %v28
    %100 = vmatprep.subr.mxu0 0.0
    %101 = vmatpush1.msra.mxu0 %v27
    %102 = vmatprep.subr.mxu0 0.0
    %103 = vmatpush2.msra.mxu0 0.0
    %104 = vmatprep.subr.mxu0 0.0
    %105 = vmatpush2.msra.mxu0 0.0
    %106 = vmatprep.subr.mxu0 0.0
    %107 = vmatpush2.msra.mxu0 0.0
    %108 = vmatprep.subr.mxu0 0.0
    %109 = vmatpush2.msra.mxu0 0.0
    %110 = vmatprep.subr.mxu0 0.0
    %111 = vmatpush2.msra.mxu0 0.0
    %112 = vmatprep.subr.mxu0 0.0
    %113 = vmatpush2.msra.mxu0 0.0
    %114 = vmatprep.subr.mxu0 0.0
    %115 = vmatpush2.msra.mxu0 0.0
    %116 = vmatprep.subr.mxu0 0.0
    %117 = vmatpush2.msra.mxu0 0.0
    %118 = vmatprep.subr.mxu0 0.0
    %119 = vmatpush2.msra.mxu0 0.0
    %120 = vmatprep.subr.mxu0 0.0
    %121 = vmatpush2.msra.mxu0 0.0
    %122 = vmatprep.subr.mxu0 0.0
    %123 = vmatpush2.msra.mxu0 0.0
    %124 = vmatprep.subr.mxu0 0.0
    %125 = vmatpush2.msra.mxu0 0.0
    %126 = vmatprep.subr.mxu0 0.0
    %127 = vmatpush2.msra.mxu0 0.0
    %128 = vmatprep.subr.mxu0 0.0
    %129 = vmatpush2.msra.mxu0 0.0
    %130 = vmatprep.subr.mxu0 0.0
    %131 = vmatpush2.msra.mxu0 0.0
    %132 = vmatprep.subr.mxu0 0.0
    %133 = vmatpush2.msra.mxu0 0.0
    %134 = vmatprep.mubr.f32.mxu0 0.0
    %135 = vmatmul.mubr.f32.gmra.mxu0 %v59
    %v136 = vpop.f32.mrf.mxu0
    %v137 = vadd.f32 %v40, %v136
    %v138 = vpop.f32.mrf.mxu0
    %139 = vmatprep.mubr.f32.mxu0 0.0
    %140 = vmatmul.mubr.f32.gmra.mxu0 %v62
    %v141 = vpop.f32.mrf.mxu0
    %v142 = vadd.f32 %v45, %v141
    %v143 = vpop.f32.mrf.mxu0
    %144 = vmatprep.mubr.f32.mxu0 0.0
    %145 = vmatmul.mubr.f32.gmra.mxu0 %v65
    %v146 = vpop.f32.mrf.mxu0
    %v147 = vadd.f32 %v50, %v146
    %v148 = vpop.f32.mrf.mxu0
    %149 = vmatprep.mubr.f32.mxu0 0.0
    %150 = vmatmul.mubr.f32.gmra.mxu0 %v68
    %v151 = vpop.f32.mrf.mxu0
    %v152 = vadd.f32 %v55, %v151
    %v153 = vpop.f32.mrf.mxu0
    %154 = vdwg.mxu0
    %v155 = vtanh.pop %v137
    %v156 = vtanh.pop %v142
    %v157 = vtanh.pop %v147
    %v158 = vtanh.pop %v152
    %v159 = vld [vmem:[%s3] sm:$0xff]
    %v160 = vld [vmem:[%s3 + $0x8] sm:$0xff]
    %v161 = vld [vmem:[%s3 + $0x10] sm:$0xff]
    %v162 = vld [vmem:[%s3 + $0x18] sm:$0xff]
    %v163 = vld [vmem:[%s4] sm:$0xff]
    %v164 = vld [vmem:[%s4 + $0x8] sm:$0xff]
    %v165 = vld [vmem:[%s4 + $0x10] sm:$0xff]
    %v166 = vld [vmem:[%s4 + $0x18] sm:$0xff]
    %168 = vset.pattern.permute.xlu0 0
    %169 = vperm.xlu0 %168, %v163
    %v170 = vpop.permute.xlu0 %169
    %173 = vset.pattern.permute.xlu0 0
    %174 = vperm.xlu0 %173, %v164
    %v175 = vpop.permute.xlu0 %174
    %178 = vset.pattern.permute.xlu0 0
    %179 = vperm.xlu0 %178, %v165
    %v180 = vpop.permute.xlu0 %179
    %183 = vset.pattern.permute.xlu0 0
    %184 = vperm.xlu0 %183, %v166
    %v185 = vpop.permute.xlu0 %184
    %vm187 = vcmask 261120
    %v189 = vsel %vm187, %v159, 0
    %v192 = vsel %vm187, %v160, 0
    %v195 = vsel %vm187, %v161, 0
    %v198 = vsel %vm187, %v162, 0
    %200 = vmatprep.subr.mxu0 0.0
    %201 = vmatpush1.msra.mxu0 0.0
    %202 = vmatprep.subr.mxu0 0.0
    %203 = vmatpush1.msra.mxu0 0.0
    %204 = vmatprep.subr.mxu0 0.0
    %205 = vmatpush1.msra.mxu0 0.0
    %206 = vmatprep.subr.mxu0 0.0
    %207 = vmatpush1.msra.mxu0 0.0
    %208 = vmatprep.subr.mxu0 0.0
    %209 = vmatpush1.msra.mxu0 0.0
    %210 = vmatprep.subr.mxu0 0.0
    %211 = vmatpush1.msra.mxu0 0.0
    %212 = vmatprep.subr.mxu0 0.0
    %213 = vmatpush1.msra.mxu0 0.0
    %214 = vmatprep.subr.mxu0 0.0
    %215 = vmatpush1.msra.mxu0 0.0
    %216 = vmatprep.subr.mxu0 0.0
    %217 = vmatpush1.msra.mxu0 0.0
    %218 = vmatprep.subr.mxu0 0.0
    %219 = vmatpush1.msra.mxu0 0.0
    %220 = vmatprep.subr.mxu0 0.0
    %221 = vmatpush1.msra.mxu0 0.0
    %222 = vmatprep.subr.mxu0 0.0
    %223 = vmatpush1.msra.mxu0 0.0
    %224 = vmatprep.subr.mxu0 0.0
    %225 = vmatpush1.msra.mxu0 %v158
    %226 = vmatprep.subr.mxu0 0.0
    %227 = vmatpush1.msra.mxu0 %v157
    %228 = vmatprep.subr.mxu0 0.0
    %229 = vmatpush1.msra.mxu0 %v156
    %230 = vmatprep.subr.mxu0 0.0
    %231 = vmatpush1.msra.mxu0 %v155
    %232 = vmatprep.subr.mxu0 0.0
    %233 = vmatpush2.msra.mxu0 0.0
    %234 = vmatprep.subr.mxu0 0.0
    %235 = vmatpush2.msra.mxu0 0.0
    %236 = vmatprep.subr.mxu0 0.0
    %237 = vmatpush2.msra.mxu0 0.0
    %238 = vmatprep.subr.mxu0 0.0
    %239 = vmatpush2.msra.mxu0 0.0
    %240 = vmatprep.subr.mxu0 0.0
    %241 = vmatpush2.msra.mxu0 0.0
    %242 = vmatprep.subr.mxu0 0.0
    %243 = vmatpush2.msra.mxu0 0.0
    %244 = vmatprep.subr.mxu0 0.0
    %245 = vmatpush2.msra.mxu0 0.0
    %246 = vmatprep.subr.mxu0 0.0
    %247 = vmatpush2.msra.mxu0 0.0
    %248 = vmatprep.subr.mxu0 0.0
    %249 = vmatpush2.msra.mxu0 0.0
    %250 = vmatprep.subr.mxu0 0.0
    %251 = vmatpush2.msra.mxu0 0.0
    %252 = vmatprep.subr.mxu0 0.0
    %253 = vmatpush2.msra.mxu0 0.0
    %254 = vmatprep.subr.mxu0 0.0
    %255 = vmatpush2.msra.mxu0 0.0
    %256 = vmatprep.subr.mxu0 0.0
    %257 = vmatpush2.msra.mxu0 0.0
    %258 = vmatprep.subr.mxu0 0.0
    %259 = vmatpush2.msra.mxu0 0.0
    %260 = vmatprep.subr.mxu0 0.0
    %261 = vmatpush2.msra.mxu0 0.0
    %262 = vmatprep.subr.mxu0 0.0
    %263 = vmatpush2.msra.mxu0 0.0
    %264 = vmatprep.mubr.f32.mxu0 0.0
    %265 = vmatmul.mubr.f32.gmra.mxu0 %v189
    %v266 = vpop.f32.mrf.mxu0
    %v267 = vadd.f32 %v170, %v266
    %v268 = vpop.f32.mrf.mxu0
    %269 = vmatprep.mubr.f32.mxu0 0.0
    %270 = vmatmul.mubr.f32.gmra.mxu0 %v192
    %v271 = vpop.f32.mrf.mxu0
    %v272 = vadd.f32 %v175, %v271
    %v273 = vpop.f32.mrf.mxu0
    %274 = vmatprep.mubr.f32.mxu0 0.0
    %275 = vmatmul.mubr.f32.gmra.mxu0 %v195
    %v276 = vpop.f32.mrf.mxu0
    %v277 = vadd.f32 %v180, %v276
    %v278 = vpop.f32.mrf.mxu0
    %279 = vmatprep.mubr.f32.mxu0 0.0
    %280 = vmatmul.mubr.f32.gmra.mxu0 %v198
    %v281 = vpop.f32.mrf.mxu0
    %v282 = vadd.f32 %v185, %v281
    %v283 = vpop.f32.mrf.mxu0
    %284 = vdwg.mxu0
    %v285 = vtanh.pop %v267
    %v286 = vtanh.pop %v272
    %v287 = vtanh.pop %v277
    %v288 = vtanh.pop %v282
    %v289 = vld [vmem:[%s5] sm:$0xff]
    %v290 = vld [vmem:[%s6] sm:$0xff]
    %292 = vset.pattern.permute.xlu0 0
    %293 = vperm.xlu0 %292, %v290
    %v294 = vpop.permute.xlu0 %293
    %v297 = vsel %vm187, %v289, 0
    %299 = vmatprep.subr.mxu0 0.0
    %300 = vmatpush1.msra.mxu0 0.0
    %301 = vmatprep.subr.mxu0 0.0
    %302 = vmatpush1.msra.mxu0 0.0
    %303 = vmatprep.subr.mxu0 0.0
    %304 = vmatpush1.msra.mxu0 0.0
    %305 = vmatprep.subr.mxu0 0.0
    %306 = vmatpush1.msra.mxu0 0.0
    %307 = vmatprep.subr.mxu0 0.0
    %308 = vmatpush1.msra.mxu0 0.0
    %309 = vmatprep.subr.mxu0 0.0
    %310 = vmatpush1.msra.mxu0 0.0
    %311 = vmatprep.subr.mxu0 0.0
    %312 = vmatpush1.msra.mxu0 0.0
    %313 = vmatprep.subr.mxu0 0.0
    %314 = vmatpush1.msra.mxu0 0.0
    %315 = vmatprep.subr.mxu0 0.0
    %316 = vmatpush1.msra.mxu0 0.0
    %317 = vmatprep.subr.mxu0 0.0
    %318 = vmatpush1.msra.mxu0 0.0
    %319 = vmatprep.subr.mxu0 0.0
    %320 = vmatpush1.msra.mxu0 0.0
    %321 = vmatprep.subr.mxu0 0.0
    %322 = vmatpush1.msra.mxu0 0.0
    %323 = vmatprep.subr.mxu0 0.0
    %324 = vmatpush1.msra.mxu0 %v288
    %325 = vmatprep.subr.mxu0 0.0
    %326 = vmatpush1.msra.mxu0 %v287
    %327 = vmatprep.subr.mxu0 0.0
    %328 = vmatpush1.msra.mxu0 %v286
    %329 = vmatprep.subr.mxu0 0.0
    %330 = vmatpush1.msra.mxu0 %v285
    %331 = vmatprep.subr.mxu0 0.0
    %332 = vmatpush2.msra.mxu0 0.0
    %333 = vmatprep.subr.mxu0 0.0
    %334 = vmatpush2.msra.mxu0 0.0
    %335 = vmatprep.subr.mxu0 0.0
    %336 = vmatpush2.msra.mxu0 0.0
    %337 = vmatprep.subr.mxu0 0.0
    %338 = vmatpush2.msra.mxu0 0.0
    %339 = vmatprep.subr.mxu0 0.0
    %340 = vmatpush2.msra.mxu0 0.0
    %341 = vmatprep.subr.mxu0 0.0
    %342 = vmatpush2.msra.mxu0 0.0
    %343 = vmatprep.subr.mxu0 0.0
    %344 = vmatpush2.msra.mxu0 0.0
    %345 = vmatprep.subr.mxu0 0.0
    %346 = vmatpush2.msra.mxu0 0.0
    %347 = vmatprep.subr.mxu0 0.0
    %348 = vmatpush2.msra.mxu0 0.0
    %349 = vmatprep.subr.mxu0 0.0
    %350 = vmatpush2.msra.mxu0 0.0
    %351 = vmatprep.subr.mxu0 0.0
    %352 = vmatpush2.msra.mxu0 0.0
    %353 = vmatprep.subr.mxu0 0.0
    %354 = vmatpush2.msra.mxu0 0.0
    %355 = vmatprep.subr.mxu0 0.0
    %356 = vmatpush2.msra.mxu0 0.0
    %357 = vmatprep.subr.mxu0 0.0
    %358 = vmatpush2.msra.mxu0 0.0
    %359 = vmatprep.subr.mxu0 0.0
    %360 = vmatpush2.msra.mxu0 0.0
    %361 = vmatprep.subr.mxu0 0.0
    %362 = vmatpush2.msra.mxu0 0.0
    %363 = vmatprep.mubr.f32.mxu0 0.0
    %364 = vmatmul.mubr.f32.gmra.mxu0 %v297
    %v365 = vpop.f32.mrf.mxu0
    %v366 = vadd.f32 %v294, %v365
    %v367 = vpop.f32.mrf.mxu0
    %368 = vdwg.mxu0
    %369 = vst.msk [vmem:[#allocation2] sm:$0xff] %vm57, %v366
    // Predicated region
    $region30: #{tpu_custom_call.1} parent=1 // pred_check
      _
    $region31: #{tpu_custom_call.1} parent=1 // pred_check_branch
      %371 = sbr.rel (0) target = $region33
    $region32: #{tpu_custom_call.1} parent=1 // pred_region
      %s373 = ssub.s32 128, 128
      %374 = vsyncadd [#allocation3], %s373
      %s376 = sshll.u32 [#allocation2], 4
      %s377 = int_to_ptr.vmem [resolvable:$true] %s376
      %379 = dma.vmem_to_hbm [thread:$0]  %s377, 128, %s7, [#allocation3]
    $region33: #{tpu_custom_call.1} parent=1 // pred_fallthru
      _
    // Predicated region
    $region34: #{tpu_custom_call.1} parent=1 // pred_check
      _
    $region35: #{tpu_custom_call.1} parent=1 // pred_check_branch
      %381 = sbr.rel (0) target = $region37
    $region36: #{tpu_custom_call.1} parent=1 // pred_region
      %382 = dma.done [#allocation3], 128
    $region37: #{tpu_custom_call.1} parent=1 // pred_fallthru
      _
    %383 = vsyncpa [#allocation3], 1

</llo_original>
